<compile_context>
chip_gen: v5e
topology: v5e:2x2
jax: 0.10.0
libtpu: 0.0.40
codegen_flags: <defaults>
</compile_context>

<pallas_src>
import functools

import jax
import jax.numpy as jnp
from jax.experimental import pallas as pl
from jax.experimental.pallas import tpu as pltpu

FEAT_DIM = 2048
EMB_DIM = 128
NUM_CLASSES = 5
L2_EPS = 1e-12  # torch.nn.functional.normalize default eps
LANE = 128
SUBLANE = 8


def _round_up(x, m):
    return (x + m - 1) // m * m


def achl_head_kernel(f_ref, w1_ref, b1_ref, w2_ref, b2_ref, o_ref):
    # f_ref : [TB, 2048] (input dtype)   w1_ref: [2048, 128]   b1_ref: [1, 128] (f32)
    # w2_ref: [128, Cp]                  b2_ref: [1, Cp] (f32) o_ref : [TB, Cp] (f32)
    #
    # fc_contrastive: cast only the MXU operand in-VMEM (no HBM cast pass),
    # accumulate in f32.
    h = jnp.dot(f_ref[...].astype(w1_ref.dtype), w1_ref[...],
                preferred_element_type=jnp.float32)
    h = h + b1_ref[...]

    # L2 norm per row, in f32 (v5e has no bf16 VPU/EUP path).
    # max(sqrt(sq), eps) == sqrt(max(sq, eps^2)) for sq >= 0  ->  one EUP rsqrt.
    sq = jnp.sum(h * h, axis=1, keepdims=True)                     # [TB, 1]
    inv_norm = jax.lax.rsqrt(jnp.maximum(sq, L2_EPS * L2_EPS))     # [TB, 1]

    # fc_class: the per-row scale commutes with the matmul; apply after the dot.
    u = jnp.dot(h.astype(w2_ref.dtype), w2_ref[...],
                preferred_element_type=jnp.float32)                # [TB, Cp]
    o_ref[...] = (u * inv_norm + b2_ref[...]).astype(o_ref.dtype)


def prepare_params(w1, b1, w2, b2, *, param_dtype=jnp.float32):
    """One-time parameter prep (hoisted out of the per-call path).

    Pads the class dim to a full 128-lane slab so the second matmul is a full
    [TB,128]@[128,128] MXU tile and the output store is an unmasked,
    lane-dense vst.  Returns (w1_p, b1_p, w2_p, b2_p, num_classes).
    """
    C = w2.shape[1]
    c_pad = _round_up(max(C, LANE), LANE)
    w1_p = w1.astype(param_dtype)
    b1_p = b1.astype(jnp.float32).reshape(1, EMB_DIM)
    w2_p = jnp.zeros((EMB_DIM, c_pad), param_dtype).at[:, :C].set(w2.astype(param_dtype))
    b2_p = jnp.zeros((1, c_pad), jnp.float32).at[0, :C].set(b2.astype(jnp.float32))
    return w1_p, b1_p, w2_p, b2_p, C


@functools.partial(jax.jit, static_argnames=("block_b",))
def _achl_head_padded(features, w1_p, b1_p, w2_p, b2_p, *, block_b=512):
    """features: [B, 2048] (f32 or bf16, read as-is). Returns padded [B, 128] logits (f32)."""
    B, F = features.shape
    assert F == FEAT_DIM
    c_pad = w2_p.shape[1]

    # Batch tile: multiple of 8 sublanes; capped at ceil(B/2) so the grid has
    # >= 2 steps whenever B allows it (keeps both v7x TensorCores busy).
    if B <= SUBLANE:
        tb = B                                   # single full-extent block
    else:
        tb = min(block_b, _round_up(pl.cdiv(B, 2), SUBLANE))
        tb = max(SUBLANE, (tb // SUBLANE) * SUBLANE)
    grid = (pl.cdiv(B, tb),)                     # partial last block is masked by Pallas

    f_isize = jnp.dtype(features.dtype).itemsize
    w_isize = jnp.dtype(w1_p.dtype).itemsize
    cost = pl.CostEstimate(
        flops=2 * B * FEAT_DIM * EMB_DIM + 2 * B * EMB_DIM * c_pad,
        transcendentals=B,                                   # one rsqrt per row
        bytes_accessed=(B * FEAT_DIM * f_isize               # features in
                        + FEAT_DIM * EMB_DIM * w_isize       # w1
                        + EMB_DIM * c_pad * w_isize          # w2 (padded)
                        + (EMB_DIM + c_pad) * 4              # biases
                        + B * c_pad * 4),                    # logits out
    )

    return pl.pallas_call(
        achl_head_kernel,
        out_shape=jax.ShapeDtypeStruct((B, c_pad), jnp.float32),
        grid=grid,
        in_specs=[
            pl.BlockSpec((tb, FEAT_DIM), lambda i: (i, 0)),       # features: tiled over B
            pl.BlockSpec((FEAT_DIM, EMB_DIM), lambda i: (0, 0)),  # w1: resident
            pl.BlockSpec((1, EMB_DIM), lambda i: (0, 0)),         # b1: resident
            pl.BlockSpec((EMB_DIM, c_pad), lambda i: (0, 0)),     # w2: resident
            pl.BlockSpec((1, c_pad), lambda i: (0, 0)),           # b2: resident
        ],
        out_specs=pl.BlockSpec((tb, c_pad), lambda i: (i, 0)),
        compiler_params=pltpu.CompilerParams(
            dimension_semantics=("parallel",),       # megacore-shards B on v7x
            vmem_limit_bytes=32 * 1024 * 1024,       # headroom over v5e's 16 MiB default
        ),
        cost_estimate=cost,
    )(features, w1_p, b1_p, w2_p, b2_p)


def achl_head(features, params, *, block_b=512):
    """Forward pass of the ACHL head. params = prepare_params(...)."""
    w1_p, b1_p, w2_p, b2_p, num_classes = params
    out = _achl_head_padded(features, w1_p, b1_p, w2_p, b2_p, block_b=block_b)
    # Note: consumers that can index lazily should use the padded (B, 128)
    # slab directly; this thin slice is the only remaining wrapper pass.
    return out[:, :num_classes]


def init_params(key, num_classes=NUM_CLASSES):
    """Deterministic init matching nn.Linear default: U(-1/sqrt(fan_in), 1/sqrt(fan_in))."""
    k1, k2, k3, k4 = jax.random.split(key, 4)
    bound1 = 1.0 / jnp.sqrt(FEAT_DIM)
    bound2 = 1.0 / jnp.sqrt(EMB_DIM)
    w1 = jax.random.uniform(k1, (FEAT_DIM, EMB_DIM), jnp.float32, -bound1, bound1)
    b1 = jax.random.uniform(k2, (EMB_DIM,), jnp.float32, -bound1, bound1)
    w2 = jax.random.uniform(k3, (EMB_DIM, num_classes), jnp.float32, -bound2, bound2)
    b2 = jax.random.uniform(k4, (num_classes,), jnp.float32, -bound2, bound2)
    return w1, b1, w2, b2


def reference(features, w1, b1, w2, b2):
    h = features @ w1 + b1
    n = jnp.sqrt(jnp.sum(h * h, axis=1, keepdims=True))
    h = h / jnp.maximum(n, L2_EPS)
    return h @ w2 + b2


if __name__ == "__main__":
    key = jax.random.PRNGKey(0)
    k_feat, k_params = jax.random.split(key)

    # TODO(synk): `features` stands in for base_model(x) output of ResNet50.
    B = 2
    features = jax.random.normal(k_feat, (B, FEAT_DIM), jnp.float32)
    w1, b1, w2, b2 = init_params(k_params)

    # f32 params, tight tolerance vs reference. Single full-extent block (B=2).
    params_f32 = prepare_params(w1, b1, w2, b2, param_dtype=jnp.float32)
    logits = jax.block_until_ready(achl_head(features, params_f32))
    ref = reference(features, w1, b1, w2, b2)
    assert logits.shape == (B, NUM_CLASSES)
    assert jnp.allclose(logits, ref, atol=1e-4, rtol=1e-4), "f32 mismatch vs reference"

    # Larger batch: bf16 weights, f32 features read as-is from HBM (cast to the
    # MXU operand dtype inside the kernel only); 2-tile grid -> both v7x TCs.
    B2 = 384
    features2 = jax.random.normal(k_feat, (B2, FEAT_DIM), jnp.float32)
    params_bf16 = prepare_params(w1, b1, w2, b2, param_dtype=jnp.bfloat16)
    logits2 = jax.block_until_ready(achl_head(features2, params_bf16))
    ref2 = reference(features2, w1, b1, w2, b2)
    assert logits2.shape == (B2, NUM_CLASSES)
    assert jnp.allclose(logits2, ref2, atol=5e-2, rtol=5e-2), "bf16 mismatch vs reference"

    print("KERNEL_OK")
</pallas_src>

<mosaic_0001>
module attributes {stable_mosaic.version = 11 : i64} {
  func.func @achl_head_kernel(%arg0: i32, %arg1: memref<2x2048xf32, #tpu.memory_space<vmem>>, %arg2: memref<2048x128xf32, #tpu.memory_space<vmem>>, %arg3: memref<1x128xf32, #tpu.memory_space<vmem>>, %arg4: memref<128x128xf32, #tpu.memory_space<vmem>>, %arg5: memref<1x128xf32, #tpu.memory_space<vmem>>, %arg6: memref<2x128xf32, #tpu.memory_space<vmem>>) attributes {dimension_semantics = [#tpu.dimension_semantics<parallel>], iteration_bounds = array<i64: 1>, scalar_prefetch = 0 : i64, scratch_operands = 0 : i64, tpu.core_type = #tpu.core_type<tc>, window_params = [{transform_indices = @transform_0, window_bounds = array<i64: 2, 2048>}, {pipeline_mode = #tpu.pipeline_mode<synchronous>, transform_indices = @transform_1, window_bounds = array<i64: 2048, 128>}, {pipeline_mode = #tpu.pipeline_mode<synchronous>, transform_indices = @transform_2, window_bounds = array<i64: 1, 128>}, {pipeline_mode = #tpu.pipeline_mode<synchronous>, transform_indices = @transform_3, window_bounds = array<i64: 128, 128>}, {pipeline_mode = #tpu.pipeline_mode<synchronous>, transform_indices = @transform_4, window_bounds = array<i64: 1, 128>}, {transform_indices = @transform_5, window_bounds = array<i64: 2, 128>}]} {
    %c0 = arith.constant 0 : index
    %c0_0 = arith.constant 0 : index
    %0 = vector.load %arg1[%c0, %c0_0] : memref<2x2048xf32, #tpu.memory_space<vmem>>, vector<2x2048xf32>
    %c0_1 = arith.constant 0 : index
    %c0_2 = arith.constant 0 : index
    %1 = vector.load %arg2[%c0_1, %c0_2] : memref<2048x128xf32, #tpu.memory_space<vmem>>, vector<2048x128xf32>
    %cst = arith.constant dense<0.000000e+00> : vector<2x128xf32>
    %2 = tpu.matmul %0, %1, %cst {dimension_numbers = #tpu.dot_dimension_numbers<[1], [0], [0], [1], [0, 0, 1, 1], [], []>} : vector<2x2048xf32>, vector<2048x128xf32>, vector<2x128xf32> -> vector<2x128xf32>
    %c0_3 = arith.constant 0 : index
    %c0_4 = arith.constant 0 : index
    %3 = vector.load %arg3[%c0_3, %c0_4] : memref<1x128xf32, #tpu.memory_space<vmem>>, vector<1x128xf32>
    %4 = vector.broadcast %3 : vector<1x128xf32> to vector<2x128xf32>
    %5 = arith.addf %2, %4 : vector<2x128xf32>
    %6 = arith.mulf %5, %5 : vector<2x128xf32>
    %cst_5 = arith.constant dense<0.000000e+00> : vector<2xf32>
    %7 = vector.multi_reduction <add>, %6, %cst_5 [1] : vector<2x128xf32> to vector<2xf32>
    %8 = vector.shape_cast %7 : vector<2xf32> to vector<2x1xf32>
    %cst_6 = arith.constant 1.000000e-24 : f32
    %9 = vector.broadcast %cst_6 : f32 to vector<2x1xf32>
    %10 = arith.maximumf %8, %9 : vector<2x1xf32>
    %11 = math.rsqrt %10 : vector<2x1xf32>
    %c0_7 = arith.constant 0 : index
    %c0_8 = arith.constant 0 : index
    %12 = vector.load %arg4[%c0_7, %c0_8] : memref<128x128xf32, #tpu.memory_space<vmem>>, vector<128x128xf32>
    %cst_9 = arith.constant dense<0.000000e+00> : vector<2x128xf32>
    %13 = tpu.matmul %5, %12, %cst_9 {dimension_numbers = #tpu.dot_dimension_numbers<[1], [0], [0], [1], [0, 0, 1, 1], [], []>} : vector<2x128xf32>, vector<128x128xf32>, vector<2x128xf32> -> vector<2x128xf32>
    %14 = vector.broadcast %11 : vector<2x1xf32> to vector<2x128xf32>
    %15 = arith.mulf %13, %14 : vector<2x128xf32>
    %c0_10 = arith.constant 0 : index
    %c0_11 = arith.constant 0 : index
    %16 = vector.load %arg5[%c0_10, %c0_11] : memref<1x128xf32, #tpu.memory_space<vmem>>, vector<1x128xf32>
    %17 = vector.broadcast %16 : vector<1x128xf32> to vector<2x128xf32>
    %18 = arith.addf %15, %17 : vector<2x128xf32>
    %c0_12 = arith.constant 0 : index
    %c0_13 = arith.constant 0 : index
    %19 = vector.load %arg6[%c0_12, %c0_13] : memref<2x128xf32, #tpu.memory_space<vmem>>, vector<2x128xf32>
    tpu.vector_store %arg6[%c0_12, %c0_13], %18 {strides = array<i32>} : memref<2x128xf32, #tpu.memory_space<vmem>>, vector<2x128xf32>,
    return
  }
  func.func @transform_0(%arg0: i32) -> (i32, i32) {
    %c0_i32 = arith.constant 0 : i32
    %c0_i32_0 = arith.constant 0 : i32
    return %arg0, %c0_i32 : i32, i32
  }
  func.func @transform_1(%arg0: i32) -> (i32, i32) {
    %c0_i32 = arith.constant 0 : i32
    %c0_i32_0 = arith.constant 0 : i32
    %c0_i32_1 = arith.constant 0 : i32
    return %c0_i32, %c0_i32_0 : i32, i32
  }
  func.func @transform_2(%arg0: i32) -> (i32, i32) {
    %c0_i32 = arith.constant 0 : i32
    %c0_i32_0 = arith.constant 0 : i32
    %c0_i32_1 = arith.constant 0 : i32
    return %c0_i32, %c0_i32_0 : i32, i32
  }
  func.func @transform_3(%arg0: i32) -> (i32, i32) {
    %c0_i32 = arith.constant 0 : i32
    %c0_i32_0 = arith.constant 0 : i32
    %c0_i32_1 = arith.constant 0 : i32
    return %c0_i32, %c0_i32_0 : i32, i32
  }
  func.func @transform_4(%arg0: i32) -> (i32, i32) {
    %c0_i32 = arith.constant 0 : i32
    %c0_i32_0 = arith.constant 0 : i32
    %c0_i32_1 = arith.constant 0 : i32
    return %c0_i32, %c0_i32_0 : i32, i32
  }
  func.func @transform_5(%arg0: i32) -> (i32, i32) {
    %c0_i32 = arith.constant 0 : i32
    %c0_i32_0 = arith.constant 0 : i32
    return %arg0, %c0_i32 : i32, i32
  }
}

</mosaic_0001>

<llo_original>
// kernel: _achl_head_padded.1
$region0: #{_achl_head_padded.1}
  #allocation0 [shape = 'u32[]', space=smem, size = 0x4, offset = 0x4, fixed_abs, tag = 'smem constant byte address 0x4 - core index']
  #allocation1 [shape = 'u32[72,128]{1,0:T(1,128)}', space=vmem, size = 0x9000, scoped, tag = 'internal scratch']
  %s0 = inlined_call_operand.hbm [shape: f32[2,2048], index: 0, kind: input, shape index: {}]
  %s1 = inlined_call_operand.hbm [shape: f32[2048,128], index: 1, kind: input, shape index: {}]
  %s2 = inlined_call_operand.vmem [shape: f32[1,128], index: 2, kind: input, shape index: {}]
  %s3 = inlined_call_operand.hbm [shape: f32[128,128], index: 3, kind: input, shape index: {}]
  %s4 = inlined_call_operand.vmem [shape: f32[1,128], index: 4, kind: input, shape index: {}]
  %s5 = inlined_call_operand.hbm [shape: f32[2,128], index: 5, kind: output, shape index: {}]
  %s6 = sld [smem:[#allocation0]]
  $region42: #{_achl_head_padded.1} parent=0
    _
  %s8 = ssub.s32 1, %s6
  %s9 = scalar_select 0, %s8, %s6
  $region1: #{_achl_head_padded.1} parent=0
    #allocation2 [shape = 'u8[16384]{0}', space=vmem, size = 0x4000, scoped, tag = 'input window, operand 0, single buffered']
    #allocation3 [shape = 's32[1]{0}', space=sflag, size = 0x4, scoped, tag = 'scoped memory for _achl_head_padded.1']
    #allocation4 [shape = 's32[1]{0}', space=sflag, size = 0x4, scoped, tag = 'scoped memory for _achl_head_padded.1']
    #allocation5 [shape = 'u8[1048576]{0}', space=vmem, size = 0x100000, scoped, tag = 'input window, operand 1, single buffered']
    #allocation6 [shape = 's32[1]{0}', space=sflag, size = 0x4, scoped, tag = 'scoped memory for _achl_head_padded.1']
    #allocation7 [shape = 'u8[65536]{0}', space=vmem, size = 0x10000, scoped, tag = 'input window, operand 3, single buffered']
    #allocation8 [shape = 'u8[1024]{0}', space=vmem, size = 0x400, scoped, tag = 'output window, operand 0, single buffered']
    %10 = vsyncpa [#allocation3], 0
    %11 = vsyncpa [#allocation6], 0
    %12 = vsyncpa [#allocation4], 0
    // Predicated region
    $region2: #{_achl_head_padded.1} parent=1 // pred_check
      _
    $region3: #{_achl_head_padded.1} parent=1 // pred_check_branch
      %14 = sbr.rel (0) target = $region5
    $region4: #{_achl_head_padded.1} parent=1 // pred_region
      %16 = vsyncadd [#allocation3], 0
      %s18 = sshll.u32 %s0, 4
      %s19 = int_to_ptr.hbm [resolvable:$true] %s18
      %s20 = sshll.u32 [#allocation2], 4
      %s21 = int_to_ptr.vmem [resolvable:$true] %s20
      %23 = dma.hbm_to_vmem [thread:$0]  %s19, 512, %s21, [#allocation3]
    $region5: #{_achl_head_padded.1} parent=1 // pred_fallthru
      _
    // Predicated region
    $region6: #{_achl_head_padded.1} parent=1 // pred_check
      _
    $region7: #{_achl_head_padded.1} parent=1 // pred_check_branch
      %25 = sbr.rel (0) target = $region9
    $region8: #{_achl_head_padded.1} parent=1 // pred_region
      %27 = vsyncadd [#allocation6], 0
      %s28 = sshll.u32 %s1, 4
      %s29 = int_to_ptr.hbm [resolvable:$true] %s28
      %s30 = sshll.u32 [#allocation5], 4
      %s31 = int_to_ptr.vmem [resolvable:$true] %s30
      %36 = dma.hbm_to_vmem [thread:$0]  %s29, 32768, %s31, [#allocation6], 128, 128, 8
    $region9: #{_achl_head_padded.1} parent=1 // pred_fallthru
      _
    // Predicated region
    $region10: #{_achl_head_padded.1} parent=1 // pred_check
      _
    $region11: #{_achl_head_padded.1} parent=1 // pred_check_branch
      %38 = sbr.rel (0) target = $region13
    $region12: #{_achl_head_padded.1} parent=1 // pred_region
      _
    $region13: #{_achl_head_padded.1} parent=1 // pred_fallthru
      _
    // Predicated region
    $region14: #{_achl_head_padded.1} parent=1 // pred_check
      _
    $region15: #{_achl_head_padded.1} parent=1 // pred_check_branch
      %40 = sbr.rel (0) target = $region17
    $region16: #{_achl_head_padded.1} parent=1 // pred_region
      %42 = vsyncadd [#allocation6], 0
      %s43 = sshll.u32 %s3, 4
      %s44 = int_to_ptr.hbm [resolvable:$true] %s43
      %s45 = sshll.u32 [#allocation7], 4
      %s46 = int_to_ptr.vmem [resolvable:$true] %s45
      %51 = dma.hbm_to_vmem [thread:$0]  %s44, 2048, %s46, [#allocation6], 128, 128, 8
    $region17: #{_achl_head_padded.1} parent=1 // pred_fallthru
      _
    // Predicated region
    $region18: #{_achl_head_padded.1} parent=1 // pred_check
      _
    $region19: #{_achl_head_padded.1} parent=1 // pred_check_branch
      %53 = sbr.rel (0) target = $region21
    $region20: #{_achl_head_padded.1} parent=1 // pred_region
      _
    $region21: #{_achl_head_padded.1} parent=1 // pred_fallthru
      _
    // Predicated region
    $region22: #{_achl_head_padded.1} parent=1 // pred_check
      _
    $region23: #{_achl_head_padded.1} parent=1 // pred_check_branch
      %55 = sbr.rel (0) target = $region25
    $region24: #{_achl_head_padded.1} parent=1 // pred_region
      %57 = dma.done [#allocation3], 512
    $region25: #{_achl_head_padded.1} parent=1 // pred_fallthru
      _
    // Predicated region
    $region26: #{_achl_head_padded.1} parent=1 // pred_check
      _
    $region27: #{_achl_head_padded.1} parent=1 // pred_check_branch
      %59 = sbr.rel (0) target = $region29
    $region28: #{_achl_head_padded.1} parent=1 // pred_region
      %61 = dma.done [#allocation6], 32768
    $region29: #{_achl_head_padded.1} parent=1 // pred_fallthru
      _
    // Predicated region
    $region30: #{_achl_head_padded.1} parent=1 // pred_check
      _
    $region31: #{_achl_head_padded.1} parent=1 // pred_check_branch
      %63 = sbr.rel (0) target = $region33
    $region32: #{_achl_head_padded.1} parent=1 // pred_region
      %65 = dma.done [#allocation6], 2048
    $region33: #{_achl_head_padded.1} parent=1 // pred_fallthru
      _
    %v66 = vld [vmem:[#allocation2] sm:$0xff]
    %v67 = vld [vmem:[#allocation2 + $0x8] sm:$0xff]
    %v68 = vld [vmem:[#allocation2 + $0x10] sm:$0xff]
    %v69 = vld [vmem:[#allocation2 + $0x18] sm:$0xff]
    %v70 = vld [vmem:[#allocation5] sm:$0xff]
    %v71 = vld [vmem:[#allocation5 + $0x8] sm:$0xff]
    %v72 = vld [vmem:[#allocation5 + $0x10] sm:$0xff]
    %v73 = vld [vmem:[#allocation5 + $0x18] sm:$0xff]
    %v74 = vld [vmem:[#allocation5 + $0x20] sm:$0xff]
    %v75 = vld [vmem:[#allocation5 + $0x28] sm:$0xff]
    %v76 = vld [vmem:[#allocation5 + $0x30] sm:$0xff]
    %v77 = vld [vmem:[#allocation5 + $0x38] sm:$0xff]
    %v78 = vld [vmem:[#allocation5 + $0x40] sm:$0xff]
    %v79 = vld [vmem:[#allocation5 + $0x48] sm:$0xff]
    %v80 = vld [vmem:[#allocation5 + $0x50] sm:$0xff]
    %v81 = vld [vmem:[#allocation5 + $0x58] sm:$0xff]
    %v82 = vld [vmem:[#allocation5 + $0x60] sm:$0xff]
    %v83 = vld [vmem:[#allocation5 + $0x68] sm:$0xff]
    %v84 = vld [vmem:[#allocation5 + $0x70] sm:$0xff]
    %v85 = vld [vmem:[#allocation5 + $0x78] sm:$0xff]
    %v86 = vld [vmem:[#allocation5 + $0x80] sm:$0xff]
    %v87 = vld [vmem:[#allocation5 + $0x88] sm:$0xff]
    %v88 = vld [vmem:[#allocation5 + $0x90] sm:$0xff]
    %v89 = vld [vmem:[#allocation5 + $0x98] sm:$0xff]
    %v90 = vld [vmem:[#allocation5 + $0xa0] sm:$0xff]
    %v91 = vld [vmem:[#allocation5 + $0xa8] sm:$0xff]
    %v92 = vld [vmem:[#allocation5 + $0xb0] sm:$0xff]
    %v93 = vld [vmem:[#allocation5 + $0xb8] sm:$0xff]
    %v94 = vld [vmem:[#allocation5 + $0xc0] sm:$0xff]
    %v95 = vld [vmem:[#allocation5 + $0xc8] sm:$0xff]
    %v96 = vld [vmem:[#allocation5 + $0xd0] sm:$0xff]
    %v97 = vld [vmem:[#allocation5 + $0xd8] sm:$0xff]
    %v98 = vld [vmem:[#allocation5 + $0xe0] sm:$0xff]
    %v99 = vld [vmem:[#allocation5 + $0xe8] sm:$0xff]
    %v100 = vld [vmem:[#allocation5 + $0xf0] sm:$0xff]
    %v101 = vld [vmem:[#allocation5 + $0xf8] sm:$0xff]
    %v102 = vld [vmem:[#allocation5 + $0x100] sm:$0xff]
    %v103 = vld [vmem:[#allocation5 + $0x108] sm:$0xff]
    %v104 = vld [vmem:[#allocation5 + $0x110] sm:$0xff]
    %v105 = vld [vmem:[#allocation5 + $0x118] sm:$0xff]
    %v106 = vld [vmem:[#allocation5 + $0x120] sm:$0xff]
    %v107 = vld [vmem:[#allocation5 + $0x128] sm:$0xff]
    %v108 = vld [vmem:[#allocation5 + $0x130] sm:$0xff]
    %v109 = vld [vmem:[#allocation5 + $0x138] sm:$0xff]
    %v110 = vld [vmem:[#allocation5 + $0x140] sm:$0xff]
    %v111 = vld [vmem:[#allocation5 + $0x148] sm:$0xff]
    %v112 = vld [vmem:[#allocation5 + $0x150] sm:$0xff]
    %v113 = vld [vmem:[#allocation5 + $0x158] sm:$0xff]
    %v114 = vld [vmem:[#allocation5 + $0x160] sm:$0xff]
    %v115 = vld [vmem:[#allocation5 + $0x168] sm:$0xff]
    %v116 = vld [vmem:[#allocation5 + $0x170] sm:$0xff]
    %v117 = vld [vmem:[#allocation5 + $0x178] sm:$0xff]
    %v118 = vld [vmem:[#allocation5 + $0x180] sm:$0xff]
    %v119 = vld [vmem:[#allocation5 + $0x188] sm:$0xff]
    %v120 = vld [vmem:[#allocation5 + $0x190] sm:$0xff]
    %v121 = vld [vmem:[#allocation5 + $0x198] sm:$0xff]
    %v122 = vld [vmem:[#allocation5 + $0x1a0] sm:$0xff]
    %v123 = vld [vmem:[#allocation5 + $0x1a8] sm:$0xff]
    %v124 = vld [vmem:[#allocation5 + $0x1b0] sm:$0xff]
    %v125 = vld [vmem:[#allocation5 + $0x1b8] sm:$0xff]
    %v126 = vld [vmem:[#allocation5 + $0x1c0] sm:$0xff]
    %v127 = vld [vmem:[#allocation5 + $0x1c8] sm:$0xff]
    %v128 = vld [vmem:[#allocation5 + $0x1d0] sm:$0xff]
    %v129 = vld [vmem:[#allocation5 + $0x1d8] sm:$0xff]
    %v130 = vld [vmem:[#allocation5 + $0x1e0] sm:$0xff]
    %v131 = vld [vmem:[#allocation5 + $0x1e8] sm:$0xff]
    %v132 = vld [vmem:[#allocation5 + $0x1f0] sm:$0xff]
    %v133 = vld [vmem:[#allocation5 + $0x1f8] sm:$0xff]
    %v134 = vld [vmem:[#allocation5 + $0x200] sm:$0xff]
    %v135 = vld [vmem:[#allocation5 + $0x208] sm:$0xff]
    %v136 = vld [vmem:[#allocation5 + $0x210] sm:$0xff]
    %v137 = vld [vmem:[#allocation5 + $0x218] sm:$0xff]
    %v138 = vld [vmem:[#allocation5 + $0x220] sm:$0xff]
    %v139 = vld [vmem:[#allocation5 + $0x228] sm:$0xff]
    %v140 = vld [vmem:[#allocation5 + $0x230] sm:$0xff]
    %v141 = vld [vmem:[#allocation5 + $0x238] sm:$0xff]
    %v142 = vld [vmem:[#allocation5 + $0x240] sm:$0xff]
    %v143 = vld [vmem:[#allocation5 + $0x248] sm:$0xff]
    %v144 = vld [vmem:[#allocation5 + $0x250] sm:$0xff]
    %v145 = vld [vmem:[#allocation5 + $0x258] sm:$0xff]
    %v146 = vld [vmem:[#allocation5 + $0x260] sm:$0xff]
    %v147 = vld [vmem:[#allocation5 + $0x268] sm:$0xff]
    %v148 = vld [vmem:[#allocation5 + $0x270] sm:$0xff]
    %v149 = vld [vmem:[#allocation5 + $0x278] sm:$0xff]
    %v150 = vld [vmem:[#allocation5 + $0x280] sm:$0xff]
    %v151 = vld [vmem:[#allocation5 + $0x288] sm:$0xff]
    %v152 = vld [vmem:[#allocation5 + $0x290] sm:$0xff]
    %v153 = vld [vmem:[#allocation5 + $0x298] sm:$0xff]
    %v154 = vld [vmem:[#allocation5 + $0x2a0] sm:$0xff]
    %v155 = vld [vmem:[#allocation5 + $0x2a8] sm:$0xff]
    %v156 = vld [vmem:[#allocation5 + $0x2b0] sm:$0xff]
    %v157 = vld [vmem:[#allocation5 + $0x2b8] sm:$0xff]
    %v158 = vld [vmem:[#allocation5 + $0x2c0] sm:$0xff]
    %v159 = vld [vmem:[#allocation5 + $0x2c8] sm:$0xff]
    %v160 = vld [vmem:[#allocation5 + $0x2d0] sm:$0xff]
    %v161 = vld [vmem:[#allocation5 + $0x2d8] sm:$0xff]
    %v162 = vld [vmem:[#allocation5 + $0x2e0] sm:$0xff]
    %v163 = vld [vmem:[#allocation5 + $0x2e8] sm:$0xff]
    %v164 = vld [vmem:[#allocation5 + $0x2f0] sm:$0xff]
    %v165 = vld [vmem:[#allocation5 + $0x2f8] sm:$0xff]
    %v166 = vld [vmem:[#allocation5 + $0x300] sm:$0xff]
    %v167 = vld [vmem:[#allocation5 + $0x308] sm:$0xff]
    %v168 = vld [vmem:[#allocation5 + $0x310] sm:$0xff]
    %v169 = vld [vmem:[#allocation5 + $0x318] sm:$0xff]
    %v170 = vld [vmem:[#allocation5 + $0x320] sm:$0xff]
    %v171 = vld [vmem:[#allocation5 + $0x328] sm:$0xff]
    %v172 = vld [vmem:[#allocation5 + $0x330] sm:$0xff]
    %v173 = vld [vmem:[#allocation5 + $0x338] sm:$0xff]
    %v174 = vld [vmem:[#allocation5 + $0x340] sm:$0xff]
    %v175 = vld [vmem:[#allocation5 + $0x348] sm:$0xff]
    %v176 = vld [vmem:[#allocation5 + $0x350] sm:$0xff]
    %v177 = vld [vmem:[#allocation5 + $0x358] sm:$0xff]
    %v178 = vld [vmem:[#allocation5 + $0x360] sm:$0xff]
    %v179 = vld [vmem:[#allocation5 + $0x368] sm:$0xff]
    %v180 = vld [vmem:[#allocation5 + $0x370] sm:$0xff]
    %v181 = vld [vmem:[#allocation5 + $0x378] sm:$0xff]
    %v182 = vld [vmem:[#allocation5 + $0x380] sm:$0xff]
    %v183 = vld [vmem:[#allocation5 + $0x388] sm:$0xff]
    %v184 = vld [vmem:[#allocation5 + $0x390] sm:$0xff]
    %v185 = vld [vmem:[#allocation5 + $0x398] sm:$0xff]
    %v186 = vld [vmem:[#allocation5 + $0x3a0] sm:$0xff]
    %v187 = vld [vmem:[#allocation5 + $0x3a8] sm:$0xff]
    %v188 = vld [vmem:[#allocation5 + $0x3b0] sm:$0xff]
    %v189 = vld [vmem:[#allocation5 + $0x3b8] sm:$0xff]
    %v190 = vld [vmem:[#allocation5 + $0x3c0] sm:$0xff]
    %v191 = vld [vmem:[#allocation5 + $0x3c8] sm:$0xff]
    %v192 = vld [vmem:[#allocation5 + $0x3d0] sm:$0xff]
    %v193 = vld [vmem:[#allocation5 + $0x3d8] sm:$0xff]
    %v194 = vld [vmem:[#allocation5 + $0x3e0] sm:$0xff]
    %v195 = vld [vmem:[#allocation5 + $0x3e8] sm:$0xff]
    %v196 = vld [vmem:[#allocation5 + $0x3f0] sm:$0xff]
    %v197 = vld [vmem:[#allocation5 + $0x3f8] sm:$0xff]
    %v198 = vld [vmem:[#allocation5 + $0x400] sm:$0xff]
    %v199 = vld [vmem:[#allocation5 + $0x408] sm:$0xff]
    %v200 = vld [vmem:[#allocation5 + $0x410] sm:$0xff]
    %v201 = vld [vmem:[#allocation5 + $0x418] sm:$0xff]
    %v202 = vld [vmem:[#allocation5 + $0x420] sm:$0xff]
    %v203 = vld [vmem:[#allocation5 + $0x428] sm:$0xff]
    %v204 = vld [vmem:[#allocation5 + $0x430] sm:$0xff]
    %v205 = vld [vmem:[#allocation5 + $0x438] sm:$0xff]
    %v206 = vld [vmem:[#allocation5 + $0x440] sm:$0xff]
    %v207 = vld [vmem:[#allocation5 + $0x448] sm:$0xff]
    %v208 = vld [vmem:[#allocation5 + $0x450] sm:$0xff]
    %v209 = vld [vmem:[#allocation5 + $0x458] sm:$0xff]
    %v210 = vld [vmem:[#allocation5 + $0x460] sm:$0xff]
    %v211 = vld [vmem:[#allocation5 + $0x468] sm:$0xff]
    %v212 = vld [vmem:[#allocation5 + $0x470] sm:$0xff]
    %v213 = vld [vmem:[#allocation5 + $0x478] sm:$0xff]
    %v214 = vld [vmem:[#allocation5 + $0x480] sm:$0xff]
    %v215 = vld [vmem:[#allocation5 + $0x488] sm:$0xff]
    %v216 = vld [vmem:[#allocation5 + $0x490] sm:$0xff]
    %v217 = vld [vmem:[#allocation5 + $0x498] sm:$0xff]
    %v218 = vld [vmem:[#allocation5 + $0x4a0] sm:$0xff]
    %v219 = vld [vmem:[#allocation5 + $0x4a8] sm:$0xff]
    %v220 = vld [vmem:[#allocation5 + $0x4b0] sm:$0xff]
    %v221 = vld [vmem:[#allocation5 + $0x4b8] sm:$0xff]
    %v222 = vld [vmem:[#allocation5 + $0x4c0] sm:$0xff]
    %v223 = vld [vmem:[#allocation5 + $0x4c8] sm:$0xff]
    %v224 = vld [vmem:[#allocation5 + $0x4d0] sm:$0xff]
    %v225 = vld [vmem:[#allocation5 + $0x4d8] sm:$0xff]
    %v226 = vld [vmem:[#allocation5 + $0x4e0] sm:$0xff]
    %v227 = vld [vmem:[#allocation5 + $0x4e8] sm:$0xff]
    %v228 = vld [vmem:[#allocation5 + $0x4f0] sm:$0xff]
    %v229 = vld [vmem:[#allocation5 + $0x4f8] sm:$0xff]
    %v230 = vld [vmem:[#allocation5 + $0x500] sm:$0xff]
    %v231 = vld [vmem:[#allocation5 + $0x508] sm:$0xff]
    %v232 = vld [vmem:[#allocation5 + $0x510] sm:$0xff]
    %v233 = vld [vmem:[#allocation5 + $0x518] sm:$0xff]
    %v234 = vld [vmem:[#allocation5 + $0x520] sm:$0xff]
    %v235 = vld [vmem:[#allocation5 + $0x528] sm:$0xff]
    %v236 = vld [vmem:[#allocation5 + $0x530] sm:$0xff]
    %v237 = vld [vmem:[#allocation5 + $0x538] sm:$0xff]
    %v238 = vld [vmem:[#allocation5 + $0x540] sm:$0xff]
    %v239 = vld [vmem:[#allocation5 + $0x548] sm:$0xff]
    %v240 = vld [vmem:[#allocation5 + $0x550] sm:$0xff]
    %v241 = vld [vmem:[#allocation5 + $0x558] sm:$0xff]
    %v242 = vld [vmem:[#allocation5 + $0x560] sm:$0xff]
    %v243 = vld [vmem:[#allocation5 + $0x568] sm:$0xff]
    %v244 = vld [vmem:[#allocation5 + $0x570] sm:$0xff]
    %v245 = vld [vmem:[#allocation5 + $0x578] sm:$0xff]
    %v246 = vld [vmem:[#allocation5 + $0x580] sm:$0xff]
    %v247 = vld [vmem:[#allocation5 + $0x588] sm:$0xff]
    %v248 = vld [vmem:[#allocation5 + $0x590] sm:$0xff]
    %v249 = vld [vmem:[#allocation5 + $0x598] sm:$0xff]
    %v250 = vld [vmem:[#allocation5 + $0x5a0] sm:$0xff]
    %v251 = vld [vmem:[#allocation5 + $0x5a8] sm:$0xff]
    %v252 = vld [vmem:[#allocation5 + $0x5b0] sm:$0xff]
    %v253 = vld [vmem:[#allocation5 + $0x5b8] sm:$0xff]
    %v254 = vld [vmem:[#allocation5 + $0x5c0] sm:$0xff]
    %v255 = vld [vmem:[#allocation5 + $0x5c8] sm:$0xff]
    %v256 = vld [vmem:[#allocation5 + $0x5d0] sm:$0xff]
    %v257 = vld [vmem:[#allocation5 + $0x5d8] sm:$0xff]
    %v258 = vld [vmem:[#allocation5 + $0x5e0] sm:$0xff]
    %v259 = vld [vmem:[#allocation5 + $0x5e8] sm:$0xff]
    %v260 = vld [vmem:[#allocation5 + $0x5f0] sm:$0xff]
    %v261 = vld [vmem:[#allocation5 + $0x5f8] sm:$0xff]
    %v262 = vld [vmem:[#allocation5 + $0x600] sm:$0xff]
    %v263 = vld [vmem:[#allocation5 + $0x608] sm:$0xff]
    %v264 = vld [vmem:[#allocation5 + $0x610] sm:$0xff]
    %v265 = vld [vmem:[#allocation5 + $0x618] sm:$0xff]
    %v266 = vld [vmem:[#allocation5 + $0x620] sm:$0xff]
    %v267 = vld [vmem:[#allocation5 + $0x628] sm:$0xff]
    %v268 = vld [vmem:[#allocation5 + $0x630] sm:$0xff]
    %v269 = vld [vmem:[#allocation5 + $0x638] sm:$0xff]
    %v270 = vld [vmem:[#allocation5 + $0x640] sm:$0xff]
    %v271 = vld [vmem:[#allocation5 + $0x648] sm:$0xff]
    %v272 = vld [vmem:[#allocation5 + $0x650] sm:$0xff]
    %v273 = vld [vmem:[#allocation5 + $0x658] sm:$0xff]
    %v274 = vld [vmem:[#allocation5 + $0x660] sm:$0xff]
    %v275 = vld [vmem:[#allocation5 + $0x668] sm:$0xff]
    %v276 = vld [vmem:[#allocation5 + $0x670] sm:$0xff]
    %v277 = vld [vmem:[#allocation5 + $0x678] sm:$0xff]
    %v278 = vld [vmem:[#allocation5 + $0x680] sm:$0xff]
    %v279 = vld [vmem:[#allocation5 + $0x688] sm:$0xff]
    %v280 = vld [vmem:[#allocation5 + $0x690] sm:$0xff]
    %v281 = vld [vmem:[#allocation5 + $0x698] sm:$0xff]
    %v282 = vld [vmem:[#allocation5 + $0x6a0] sm:$0xff]
    %v283 = vld [vmem:[#allocation5 + $0x6a8] sm:$0xff]
    %v284 = vld [vmem:[#allocation5 + $0x6b0] sm:$0xff]
    %v285 = vld [vmem:[#allocation5 + $0x6b8] sm:$0xff]
    %v286 = vld [vmem:[#allocation5 + $0x6c0] sm:$0xff]
    %v287 = vld [vmem:[#allocation5 + $0x6c8] sm:$0xff]
    %v288 = vld [vmem:[#allocation5 + $0x6d0] sm:$0xff]
    %v289 = vld [vmem:[#allocation5 + $0x6d8] sm:$0xff]
    %v290 = vld [vmem:[#allocation5 + $0x6e0] sm:$0xff]
    %v291 = vld [vmem:[#allocation5 + $0x6e8] sm:$0xff]
    %v292 = vld [vmem:[#allocation5 + $0x6f0] sm:$0xff]
    %v293 = vld [vmem:[#allocation5 + $0x6f8] sm:$0xff]
    %v294 = vld [vmem:[#allocation5 + $0x700] sm:$0xff]
    %v295 = vld [vmem:[#allocation5 + $0x708] sm:$0xff]
    %v296 = vld [vmem:[#allocation5 + $0x710] sm:$0xff]
    %v297 = vld [vmem:[#allocation5 + $0x718] sm:$0xff]
    %v298 = vld [vmem:[#allocation5 + $0x720] sm:$0xff]
    %v299 = vld [vmem:[#allocation5 + $0x728] sm:$0xff]
    %v300 = vld [vmem:[#allocation5 + $0x730] sm:$0xff]
    %v301 = vld [vmem:[#allocation5 + $0x738] sm:$0xff]
    %v302 = vld [vmem:[#allocation5 + $0x740] sm:$0xff]
    %v303 = vld [vmem:[#allocation5 + $0x748] sm:$0xff]
    %v304 = vld [vmem:[#allocation5 + $0x750] sm:$0xff]
    %v305 = vld [vmem:[#allocation5 + $0x758] sm:$0xff]
    %v306 = vld [vmem:[#allocation5 + $0x760] sm:$0xff]
    %v307 = vld [vmem:[#allocation5 + $0x768] sm:$0xff]
    %v308 = vld [vmem:[#allocation5 + $0x770] sm:$0xff]
    %v309 = vld [vmem:[#allocation5 + $0x778] sm:$0xff]
    %v310 = vld [vmem:[#allocation5 + $0x780] sm:$0xff]
    %v311 = vld [vmem:[#allocation5 + $0x788] sm:$0xff]
    %v312 = vld [vmem:[#allocation5 + $0x790] sm:$0xff]
    %v313 = vld [vmem:[#allocation5 + $0x798] sm:$0xff]
    %v314 = vld [vmem:[#allocation5 + $0x7a0] sm:$0xff]
    %v315 = vld [vmem:[#allocation5 + $0x7a8] sm:$0xff]
    %v316 = vld [vmem:[#allocation5 + $0x7b0] sm:$0xff]
    %v317 = vld [vmem:[#allocation5 + $0x7b8] sm:$0xff]
    %v318 = vld [vmem:[#allocation5 + $0x7c0] sm:$0xff]
    %v319 = vld [vmem:[#allocation5 + $0x7c8] sm:$0xff]
    %v320 = vld [vmem:[#allocation5 + $0x7d0] sm:$0xff]
    %v321 = vld [vmem:[#allocation5 + $0x7d8] sm:$0xff]
    %v322 = vld [vmem:[#allocation5 + $0x7e0] sm:$0xff]
    %v323 = vld [vmem:[#allocation5 + $0x7e8] sm:$0xff]
    %v324 = vld [vmem:[#allocation5 + $0x7f0] sm:$0xff]
    %v325 = vld [vmem:[#allocation5 + $0x7f8] sm:$0xff]
    %v326 = vld [vmem:[%s2] sm:$0x1]
    %v328 = vperm.slane %v326, 0
    %334 = vst [vmem:[#allocation1] ss:$4 sm:$0xff] %v66
    %s335 = scalar_lea.vmem [#allocation1], 32
    %336 = vst [vmem:[%s335] ss:$4 sm:$0xff] %v67
    %v337 = vld.sshfl [vmem:[#allocation1] sm:$0xff pattern:$0x73625140]
    %v338 = vld.sshfl [vmem:[#allocation1 + $0x8] sm:$0xff pattern:$0x73625140]
    %v339 = vld.sshfl [vmem:[#allocation1 + $0x10] sm:$0xff pattern:$0x73625140]
    %v340 = vld.sshfl [vmem:[#allocation1 + $0x18] sm:$0xff pattern:$0x73625140]
    %v341 = vld.sshfl [vmem:[#allocation1 + $0x20] sm:$0xff pattern:$0x73625140]
    %v342 = vld.sshfl [vmem:[#allocation1 + $0x28] sm:$0xff pattern:$0x73625140]
    %v343 = vld.sshfl [vmem:[#allocation1 + $0x30] sm:$0xff pattern:$0x73625140]
    %v344 = vld.sshfl [vmem:[#allocation1 + $0x38] sm:$0xff pattern:$0x73625140]
    %345 = vst [vmem:[#allocation1] ss:$4 sm:$0xff] %v68
    %346 = vst [vmem:[%s335] ss:$4 sm:$0xff] %v69
    %v347 = vld.sshfl [vmem:[#allocation1] sm:$0xff pattern:$0x73625140]
    %v348 = vld.sshfl [vmem:[#allocation1 + $0x8] sm:$0xff pattern:$0x73625140]
    %v349 = vld.sshfl [vmem:[#allocation1 + $0x10] sm:$0xff pattern:$0x73625140]
    %v350 = vld.sshfl [vmem:[#allocation1 + $0x18] sm:$0xff pattern:$0x73625140]
    %v351 = vld.sshfl [vmem:[#allocation1 + $0x20] sm:$0xff pattern:$0x73625140]
    %v352 = vld.sshfl [vmem:[#allocation1 + $0x28] sm:$0xff pattern:$0x73625140]
    %v353 = vld.sshfl [vmem:[#allocation1 + $0x30] sm:$0xff pattern:$0x73625140]
    %v354 = vld.sshfl [vmem:[#allocation1 + $0x38] sm:$0xff pattern:$0x73625140]
    %371 = vmatpush.msra.mxu0 %v85
    %372 = vmatpush.msra.mxu0 %v84
    %373 = vmatpush.msra.mxu0 %v83
    %374 = vmatpush.msra.mxu0 %v82
    %375 = vmatpush.msra.mxu0 %v81
    %376 = vmatpush.msra.mxu0 %v80
    %377 = vmatpush.msra.mxu0 %v79
    %378 = vmatpush.msra.mxu0 %v78
    %379 = vmatpush.msra.mxu0 %v77
    %380 = vmatpush.msra.mxu0 %v76
    %381 = vmatpush.msra.mxu0 %v75
    %382 = vmatpush.msra.mxu0 %v74
    %383 = vmatpush.msra.mxu0 %v73
    %384 = vmatpush.msra.mxu0 %v72
    %385 = vmatpush.msra.mxu0 %v71
    %386 = vmatpush.msra.mxu0 %v70
    %387 = vmatmul.f32.gmra.mxu0 %v337
    %v388 = vpop.f32.mrf.mxu0
    %v389 = vadd.f32 %v328, %v388
    %390 = vdwg.mxu0
    %391 = vmatpush.msra.mxu0 %v101
    %392 = vmatpush.msra.mxu0 %v100
    %393 = vmatpush.msra.mxu0 %v99
    %394 = vmatpush.msra.mxu0 %v98
    %395 = vmatpush.msra.mxu0 %v97
    %396 = vmatpush.msra.mxu0 %v96
    %397 = vmatpush.msra.mxu0 %v95
    %398 = vmatpush.msra.mxu0 %v94
    %399 = vmatpush.msra.mxu0 %v93
    %400 = vmatpush.msra.mxu0 %v92
    %401 = vmatpush.msra.mxu0 %v91
    %402 = vmatpush.msra.mxu0 %v90
    %403 = vmatpush.msra.mxu0 %v89
    %404 = vmatpush.msra.mxu0 %v88
    %405 = vmatpush.msra.mxu0 %v87
    %406 = vmatpush.msra.mxu0 %v86
    %407 = vmatmul.f32.gmra.mxu0 %v338
    %v408 = vpop.f32.mrf.mxu0
    %v409 = vadd.f32 %v389, %v408
    %410 = vdwg.mxu0
    %411 = vmatpush.msra.mxu0 %v117
    %412 = vmatpush.msra.mxu0 %v116
    %413 = vmatpush.msra.mxu0 %v115
    %414 = vmatpush.msra.mxu0 %v114
    %415 = vmatpush.msra.mxu0 %v113
    %416 = vmatpush.msra.mxu0 %v112
    %417 = vmatpush.msra.mxu0 %v111
    %418 = vmatpush.msra.mxu0 %v110
    %419 = vmatpush.msra.mxu0 %v109
    %420 = vmatpush.msra.mxu0 %v108
    %421 = vmatpush.msra.mxu0 %v107
    %422 = vmatpush.msra.mxu0 %v106
    %423 = vmatpush.msra.mxu0 %v105
    %424 = vmatpush.msra.mxu0 %v104
    %425 = vmatpush.msra.mxu0 %v103
    %426 = vmatpush.msra.mxu0 %v102
    %427 = vmatmul.f32.gmra.mxu0 %v339
    %v428 = vpop.f32.mrf.mxu0
    %v429 = vadd.f32 %v409, %v428
    %430 = vdwg.mxu0
    %431 = vmatpush.msra.mxu0 %v133
    %432 = vmatpush.msra.mxu0 %v132
    %433 = vmatpush.msra.mxu0 %v131
    %434 = vmatpush.msra.mxu0 %v130
    %435 = vmatpush.msra.mxu0 %v129
    %436 = vmatpush.msra.mxu0 %v128
    %437 = vmatpush.msra.mxu0 %v127
    %438 = vmatpush.msra.mxu0 %v126
    %439 = vmatpush.msra.mxu0 %v125
    %440 = vmatpush.msra.mxu0 %v124
    %441 = vmatpush.msra.mxu0 %v123
    %442 = vmatpush.msra.mxu0 %v122
    %443 = vmatpush.msra.mxu0 %v121
    %444 = vmatpush.msra.mxu0 %v120
    %445 = vmatpush.msra.mxu0 %v119
    %446 = vmatpush.msra.mxu0 %v118
    %447 = vmatmul.f32.gmra.mxu0 %v340
    %v448 = vpop.f32.mrf.mxu0
    %v449 = vadd.f32 %v429, %v448
    %450 = vdwg.mxu0
    %451 = vmatpush.msra.mxu0 %v149
    %452 = vmatpush.msra.mxu0 %v148
    %453 = vmatpush.msra.mxu0 %v147
    %454 = vmatpush.msra.mxu0 %v146
    %455 = vmatpush.msra.mxu0 %v145
    %456 = vmatpush.msra.mxu0 %v144
    %457 = vmatpush.msra.mxu0 %v143
    %458 = vmatpush.msra.mxu0 %v142
    %459 = vmatpush.msra.mxu0 %v141
    %460 = vmatpush.msra.mxu0 %v140
    %461 = vmatpush.msra.mxu0 %v139
    %462 = vmatpush.msra.mxu0 %v138
    %463 = vmatpush.msra.mxu0 %v137
    %464 = vmatpush.msra.mxu0 %v136
    %465 = vmatpush.msra.mxu0 %v135
    %466 = vmatpush.msra.mxu0 %v134
    %467 = vmatmul.f32.gmra.mxu0 %v341
    %v468 = vpop.f32.mrf.mxu0
    %v469 = vadd.f32 %v449, %v468
    %470 = vdwg.mxu0
    %471 = vmatpush.msra.mxu0 %v165
    %472 = vmatpush.msra.mxu0 %v164
    %473 = vmatpush.msra.mxu0 %v163
    %474 = vmatpush.msra.mxu0 %v162
    %475 = vmatpush.msra.mxu0 %v161
    %476 = vmatpush.msra.mxu0 %v160
    %477 = vmatpush.msra.mxu0 %v159
    %478 = vmatpush.msra.mxu0 %v158
    %479 = vmatpush.msra.mxu0 %v157
    %480 = vmatpush.msra.mxu0 %v156
    %481 = vmatpush.msra.mxu0 %v155
    %482 = vmatpush.msra.mxu0 %v154
    %483 = vmatpush.msra.mxu0 %v153
    %484 = vmatpush.msra.mxu0 %v152
    %485 = vmatpush.msra.mxu0 %v151
    %486 = vmatpush.msra.mxu0 %v150
    %487 = vmatmul.f32.gmra.mxu0 %v342
    %v488 = vpop.f32.mrf.mxu0
    %v489 = vadd.f32 %v469, %v488
    %490 = vdwg.mxu0
    %491 = vmatpush.msra.mxu0 %v181
    %492 = vmatpush.msra.mxu0 %v180
    %493 = vmatpush.msra.mxu0 %v179
    %494 = vmatpush.msra.mxu0 %v178
    %495 = vmatpush.msra.mxu0 %v177
    %496 = vmatpush.msra.mxu0 %v176
    %497 = vmatpush.msra.mxu0 %v175
    %498 = vmatpush.msra.mxu0 %v174
    %499 = vmatpush.msra.mxu0 %v173
    %500 = vmatpush.msra.mxu0 %v172
    %501 = vmatpush.msra.mxu0 %v171
    %502 = vmatpush.msra.mxu0 %v170
    %503 = vmatpush.msra.mxu0 %v169
    %504 = vmatpush.msra.mxu0 %v168
    %505 = vmatpush.msra.mxu0 %v167
    %506 = vmatpush.msra.mxu0 %v166
    %507 = vmatmul.f32.gmra.mxu0 %v343
    %v508 = vpop.f32.mrf.mxu0
    %v509 = vadd.f32 %v489, %v508
    %510 = vdwg.mxu0
    %511 = vmatpush.msra.mxu0 %v197
    %512 = vmatpush.msra.mxu0 %v196
    %513 = vmatpush.msra.mxu0 %v195
    %514 = vmatpush.msra.mxu0 %v194
    %515 = vmatpush.msra.mxu0 %v193
    %516 = vmatpush.msra.mxu0 %v192
    %517 = vmatpush.msra.mxu0 %v191
    %518 = vmatpush.msra.mxu0 %v190
    %519 = vmatpush.msra.mxu0 %v189
    %520 = vmatpush.msra.mxu0 %v188
    %521 = vmatpush.msra.mxu0 %v187
    %522 = vmatpush.msra.mxu0 %v186
    %523 = vmatpush.msra.mxu0 %v185
    %524 = vmatpush.msra.mxu0 %v184
    %525 = vmatpush.msra.mxu0 %v183
    %526 = vmatpush.msra.mxu0 %v182
    %527 = vmatmul.f32.gmra.mxu0 %v344
    %v528 = vpop.f32.mrf.mxu0
    %v529 = vadd.f32 %v509, %v528
    %530 = vdwg.mxu0
    %531 = vmatpush.msra.mxu0 %v213
    %532 = vmatpush.msra.mxu0 %v212
    %533 = vmatpush.msra.mxu0 %v211
    %534 = vmatpush.msra.mxu0 %v210
    %535 = vmatpush.msra.mxu0 %v209
    %536 = vmatpush.msra.mxu0 %v208
    %537 = vmatpush.msra.mxu0 %v207
    %538 = vmatpush.msra.mxu0 %v206
    %539 = vmatpush.msra.mxu0 %v205
    %540 = vmatpush.msra.mxu0 %v204
    %541 = vmatpush.msra.mxu0 %v203
    %542 = vmatpush.msra.mxu0 %v202
    %543 = vmatpush.msra.mxu0 %v201
    %544 = vmatpush.msra.mxu0 %v200
    %545 = vmatpush.msra.mxu0 %v199
    %546 = vmatpush.msra.mxu0 %v198
    %547 = vmatmul.f32.gmra.mxu0 %v347
    %v548 = vpop.f32.mrf.mxu0
    %v549 = vadd.f32 %v529, %v548
    %550 = vdwg.mxu0
    %551 = vmatpush.msra.mxu0 %v229
    %552 = vmatpush.msra.mxu0 %v228
    %553 = vmatpush.msra.mxu0 %v227
    %554 = vmatpush.msra.mxu0 %v226
    %555 = vmatpush.msra.mxu0 %v225
    %556 = vmatpush.msra.mxu0 %v224
    %557 = vmatpush.msra.mxu0 %v223
    %558 = vmatpush.msra.mxu0 %v222
    %559 = vmatpush.msra.mxu0 %v221
    %560 = vmatpush.msra.mxu0 %v220
    %561 = vmatpush.msra.mxu0 %v219
    %562 = vmatpush.msra.mxu0 %v218
    %563 = vmatpush.msra.mxu0 %v217
    %564 = vmatpush.msra.mxu0 %v216
    %565 = vmatpush.msra.mxu0 %v215
    %566 = vmatpush.msra.mxu0 %v214
    %567 = vmatmul.f32.gmra.mxu0 %v348
    %v568 = vpop.f32.mrf.mxu0
    %v569 = vadd.f32 %v549, %v568
    %570 = vdwg.mxu0
    %571 = vmatpush.msra.mxu0 %v245
    %572 = vmatpush.msra.mxu0 %v244
    %573 = vmatpush.msra.mxu0 %v243
    %574 = vmatpush.msra.mxu0 %v242
    %575 = vmatpush.msra.mxu0 %v241
    %576 = vmatpush.msra.mxu0 %v240
    %577 = vmatpush.msra.mxu0 %v239
    %578 = vmatpush.msra.mxu0 %v238
    %579 = vmatpush.msra.mxu0 %v237
    %580 = vmatpush.msra.mxu0 %v236
    %581 = vmatpush.msra.mxu0 %v235
    %582 = vmatpush.msra.mxu0 %v234
    %583 = vmatpush.msra.mxu0 %v233
    %584 = vmatpush.msra.mxu0 %v232
    %585 = vmatpush.msra.mxu0 %v231
    %586 = vmatpush.msra.mxu0 %v230
    %587 = vmatmul.f32.gmra.mxu0 %v349
    %v588 = vpop.f32.mrf.mxu0
    %v589 = vadd.f32 %v569, %v588
    %590 = vdwg.mxu0
    %591 = vmatpush.msra.mxu0 %v261
    %592 = vmatpush.msra.mxu0 %v260
    %593 = vmatpush.msra.mxu0 %v259
    %594 = vmatpush.msra.mxu0 %v258
    %595 = vmatpush.msra.mxu0 %v257
    %596 = vmatpush.msra.mxu0 %v256
    %597 = vmatpush.msra.mxu0 %v255
    %598 = vmatpush.msra.mxu0 %v254
    %599 = vmatpush.msra.mxu0 %v253
    %600 = vmatpush.msra.mxu0 %v252
    %601 = vmatpush.msra.mxu0 %v251
    %602 = vmatpush.msra.mxu0 %v250
    %603 = vmatpush.msra.mxu0 %v249
    %604 = vmatpush.msra.mxu0 %v248
    %605 = vmatpush.msra.mxu0 %v247
    %606 = vmatpush.msra.mxu0 %v246
    %607 = vmatmul.f32.gmra.mxu0 %v350
    %v608 = vpop.f32.mrf.mxu0
    %v609 = vadd.f32 %v589, %v608
    %610 = vdwg.mxu0
    %611 = vmatpush.msra.mxu0 %v277
    %612 = vmatpush.msra.mxu0 %v276
    %613 = vmatpush.msra.mxu0 %v275
    %614 = vmatpush.msra.mxu0 %v274
    %615 = vmatpush.msra.mxu0 %v273
    %616 = vmatpush.msra.mxu0 %v272
    %617 = vmatpush.msra.mxu0 %v271
    %618 = vmatpush.msra.mxu0 %v270
    %619 = vmatpush.msra.mxu0 %v269
    %620 = vmatpush.msra.mxu0 %v268
    %621 = vmatpush.msra.mxu0 %v267
    %622 = vmatpush.msra.mxu0 %v266
    %623 = vmatpush.msra.mxu0 %v265
    %624 = vmatpush.msra.mxu0 %v264
    %625 = vmatpush.msra.mxu0 %v263
    %626 = vmatpush.msra.mxu0 %v262
    %627 = vmatmul.f32.gmra.mxu0 %v351
    %v628 = vpop.f32.mrf.mxu0
    %v629 = vadd.f32 %v609, %v628
    %630 = vdwg.mxu0
    %631 = vmatpush.msra.mxu0 %v293
    %632 = vmatpush.msra.mxu0 %v292
    %633 = vmatpush.msra.mxu0 %v291
    %634 = vmatpush.msra.mxu0 %v290
    %635 = vmatpush.msra.mxu0 %v289
    %636 = vmatpush.msra.mxu0 %v288
    %637 = vmatpush.msra.mxu0 %v287
    %638 = vmatpush.msra.mxu0 %v286
    %639 = vmatpush.msra.mxu0 %v285
    %640 = vmatpush.msra.mxu0 %v284
    %641 = vmatpush.msra.mxu0 %v283
    %642 = vmatpush.msra.mxu0 %v282
    %643 = vmatpush.msra.mxu0 %v281
    %644 = vmatpush.msra.mxu0 %v280
    %645 = vmatpush.msra.mxu0 %v279
    %646 = vmatpush.msra.mxu0 %v278
    %647 = vmatmul.f32.gmra.mxu0 %v352
    %v648 = vpop.f32.mrf.mxu0
    %v649 = vadd.f32 %v629, %v648
    %650 = vdwg.mxu0
    %651 = vmatpush.msra.mxu0 %v309
    %652 = vmatpush.msra.mxu0 %v308
    %653 = vmatpush.msra.mxu0 %v307
    %654 = vmatpush.msra.mxu0 %v306
    %655 = vmatpush.msra.mxu0 %v305
    %656 = vmatpush.msra.mxu0 %v304
    %657 = vmatpush.msra.mxu0 %v303
    %658 = vmatpush.msra.mxu0 %v302
    %659 = vmatpush.msra.mxu0 %v301
    %660 = vmatpush.msra.mxu0 %v300
    %661 = vmatpush.msra.mxu0 %v299
    %662 = vmatpush.msra.mxu0 %v298
    %663 = vmatpush.msra.mxu0 %v297
    %664 = vmatpush.msra.mxu0 %v296
    %665 = vmatpush.msra.mxu0 %v295
    %666 = vmatpush.msra.mxu0 %v294
    %667 = vmatmul.f32.gmra.mxu0 %v353
    %v668 = vpop.f32.mrf.mxu0
    %v669 = vadd.f32 %v649, %v668
    %670 = vdwg.mxu0
    %671 = vmatpush.msra.mxu0 %v325
    %672 = vmatpush.msra.mxu0 %v324
    %673 = vmatpush.msra.mxu0 %v323
    %674 = vmatpush.msra.mxu0 %v322
    %675 = vmatpush.msra.mxu0 %v321
    %676 = vmatpush.msra.mxu0 %v320
    %677 = vmatpush.msra.mxu0 %v319
    %678 = vmatpush.msra.mxu0 %v318
    %679 = vmatpush.msra.mxu0 %v317
    %680 = vmatpush.msra.mxu0 %v316
    %681 = vmatpush.msra.mxu0 %v315
    %682 = vmatpush.msra.mxu0 %v314
    %683 = vmatpush.msra.mxu0 %v313
    %684 = vmatpush.msra.mxu0 %v312
    %685 = vmatpush.msra.mxu0 %v311
    %686 = vmatpush.msra.mxu0 %v310
    %687 = vmatmul.f32.gmra.mxu0 %v354
    %v688 = vpop.f32.mrf.mxu0
    %v689 = vadd.f32 %v669, %v688
    %690 = vdwg.mxu0
    %v691 = vmul.f32 %v689, %v689
    %vm692 = vcmask 1041408
    %v693 = vsel %vm692, %v691, 0.0
    %694 = vadd.xlane.f32.xlu0 %v693
    %v695 = vpop.xlane.xlu0 %694
    %v696 = vmax.f32 %v695, 1e-24
    %v697 = vrsqrt.pop %v696
    %v698 = vmul.f32 %v697, %v696
    %v699 = vmul.f32 %v698, %v697
    %v700 = vmul.f32 0.5, %v699
    %v701 = vsub.f32 1.5, %v700
    %v702 = vmul.f32 %v697, %v701
    %vm703 = vweird.f32 %v696
    %vm704 = vweird.f32 %v697
    %vm705 = vmor %vm703, %vm704
    %v706 = vsel %vm705, %v697, %v702
    %v707 = vld [vmem:[#allocation7] sm:$0xff]
    %v708 = vld [vmem:[#allocation7 + $0x8] sm:$0xff]
    %v709 = vld [vmem:[#allocation7 + $0x10] sm:$0xff]
    %v710 = vld [vmem:[#allocation7 + $0x18] sm:$0xff]
    %v711 = vld [vmem:[#allocation7 + $0x20] sm:$0xff]
    %v712 = vld [vmem:[#allocation7 + $0x28] sm:$0xff]
    %v713 = vld [vmem:[#allocation7 + $0x30] sm:$0xff]
    %v714 = vld [vmem:[#allocation7 + $0x38] sm:$0xff]
    %v715 = vld [vmem:[#allocation7 + $0x40] sm:$0xff]
    %v716 = vld [vmem:[#allocation7 + $0x48] sm:$0xff]
    %v717 = vld [vmem:[#allocation7 + $0x50] sm:$0xff]
    %v718 = vld [vmem:[#allocation7 + $0x58] sm:$0xff]
    %v719 = vld [vmem:[#allocation7 + $0x60] sm:$0xff]
    %v720 = vld [vmem:[#allocation7 + $0x68] sm:$0xff]
    %v721 = vld [vmem:[#allocation7 + $0x70] sm:$0xff]
    %v722 = vld [vmem:[#allocation7 + $0x78] sm:$0xff]
    %723 = vmatpush.msra.mxu0 %v722
    %724 = vmatpush.msra.mxu0 %v721
    %725 = vmatpush.msra.mxu0 %v720
    %726 = vmatpush.msra.mxu0 %v719
    %727 = vmatpush.msra.mxu0 %v718
    %728 = vmatpush.msra.mxu0 %v717
    %729 = vmatpush.msra.mxu0 %v716
    %730 = vmatpush.msra.mxu0 %v715
    %731 = vmatpush.msra.mxu0 %v714
    %732 = vmatpush.msra.mxu0 %v713
    %733 = vmatpush.msra.mxu0 %v712
    %734 = vmatpush.msra.mxu0 %v711
    %735 = vmatpush.msra.mxu0 %v710
    %736 = vmatpush.msra.mxu0 %v709
    %737 = vmatpush.msra.mxu0 %v708
    %738 = vmatpush.msra.mxu0 %v707
    %739 = vmatmul.f32.gmra.mxu0 %v689
    %v740 = vpop.f32.mrf.mxu0
    %v741 = vadd.f32 0.0, %v740
    %742 = vdwg.mxu0
    %v743 = vmul.f32 %v741, %v706
    %v744 = vld [vmem:[%s4] sm:$0x1]
    %v746 = vperm.slane %v744, 0
    %v748 = vadd.f32 %v743, %v746
    %749 = vst [vmem:[#allocation8] sm:$0x3] %v748
    // Predicated region
    $region34: #{_achl_head_padded.1} parent=1 // pred_check
      _
    $region35: #{_achl_head_padded.1} parent=1 // pred_check_branch
      %751 = sbr.rel (0) target = $region37
    $region36: #{_achl_head_padded.1} parent=1 // pred_region
      %753 = vsyncadd [#allocation4], 0
      %s755 = sshll.u32 [#allocation8], 4
      %s756 = int_to_ptr.vmem [resolvable:$true] %s755
      %s757 = sshll.u32 %s5, 4
      %s758 = int_to_ptr.hbm [resolvable:$true] %s757
      %760 = dma.vmem_to_hbm [thread:$0]  %s756, 32, %s758, [#allocation4]
    $region37: #{_achl_head_padded.1} parent=1 // pred_fallthru
      _
    // Predicated region
    $region38: #{_achl_head_padded.1} parent=1 // pred_check
      _
    $region39: #{_achl_head_padded.1} parent=1 // pred_check_branch
      %762 = sbr.rel (0) target = $region41
    $region40: #{_achl_head_padded.1} parent=1 // pred_region
      %764 = dma.done [#allocation4], 32
    $region41: #{_achl_head_padded.1} parent=1 // pred_fallthru
      _
    %765 = vsyncpa [#allocation3], 1
    %766 = vsyncpa [#allocation6], 1
    %767 = vsyncpa [#allocation4], 1

</llo_original>
